<compile_context>
chip_gen: v6e
topology: v6e:2x2x1
jax: 0.10.0
libtpu: 0.0.40
codegen_flags: <defaults>
</compile_context>

<pallas_src>
import math

import jax
import jax.numpy as jnp
from jax.experimental import pallas as pl
from jax.experimental.pallas import tpu as pltpu


# ----------------------------------------------------------------------------
# Generation-aware compiler params / tiling
# ----------------------------------------------------------------------------
def _chip_generation():
    try:
        info = pltpu.get_tpu_info()
        name = str(getattr(info, "chip_version", "")).lower()
    except Exception:
        name = ""
    for g in (7, 6, 5):
        if str(g) in name:
            return g
    return 6


_GEN = _chip_generation()


def _vmem_limit_bytes():
    if _GEN >= 7:
        # v7x: 64 MiB physical per TensorCore; get_tpu_info may report chip-level
        # VMEM (2 TCs), so clamp well under the per-TC budget.
        return 48 * 1024 * 1024
    cap = 128 * 1024 * 1024
    try:
        cap = int(getattr(pltpu.get_tpu_info(), "vmem_capacity_bytes", cap))
    except Exception:
        pass
    return min(cap * 3 // 4, 96 * 1024 * 1024)


_VMEM_LIMIT = _vmem_limit_bytes()


def _cparams(dim_sem):
    return pltpu.CompilerParams(
        dimension_semantics=dim_sem,
        vmem_limit_bytes=_VMEM_LIMIT,
    )


def _pick_tm(m):
    """M-tile: big blocks amortize grid overhead; v7x keeps 256 for its 64 MiB VMEM."""
    if _GEN >= 7:
        return 256 if m >= 512 else m
    if m >= 1024:
        return 512
    if m >= 512:
        return 256
    return m  # a block equal to the full dim is always a legal TPU block shape


def _pick_tn(cout):
    """Cout tile: split big output channels so a second TensorCore has work."""
    return cout if cout <= 512 else 512


# ----------------------------------------------------------------------------
# Pallas kernels
# ----------------------------------------------------------------------------
def _conv_mm_bn_kernel(x_ref, w_ref, shift_ref, o_ref):
    # x_ref: (tm, K) bf16   w_ref: (K, tn) bf16 (BN scale folded)   shift: (1, tn) f32
    acc = jnp.dot(x_ref[...], w_ref[...], preferred_element_type=jnp.float32)
    o_ref[...] = (acc + shift_ref[...]).astype(o_ref.dtype)


def _conv3x3_bn_kernel(x0_ref, x1_ref, x2_ref, w_ref, shift_ref, o_ref):
    """One output row of a 3x3 stride-1 pad-1 conv.

    x{0,1,2}_ref: rows (oh, oh+1, oh+2) of the padded bf16 spike map, each (Wp, C).
    w_ref: (3, 3, C, Cout) bf16 (BN scale folded).  o_ref: (Wo, Cout) bf16.
    """
    Wo, _ = o_ref.shape
    rows = (x0_ref, x1_ref, x2_ref)
    acc = jnp.zeros(o_ref.shape, jnp.float32)
    for di in range(3):
        for dj in range(3):
            patch = rows[di][dj:dj + Wo, :]                 # (Wo, C) static sub-window
            acc = acc + jnp.dot(patch, w_ref[di, dj],
                                preferred_element_type=jnp.float32)
    o_ref[...] = (acc + shift_ref[...]).astype(o_ref.dtype)


def _plif_step(alpha_ref, x_ref, v_ref, t):
    """ParametricLIF step (spikingjelly defaults: decay_input, v_th=1, hard reset)."""
    @pl.when(t == 0)
    def _():
        v_ref[...] = jnp.zeros_like(v_ref)

    alpha = alpha_ref[0]                                    # sigmoid(w) = 1/tau
    x = x_ref[...].astype(jnp.float32)
    v = v_ref[...] + alpha * (x - v_ref[...])
    spike = (v >= 1.0).astype(jnp.float32)
    v_ref[...] = v * (1.0 - spike)                          # hard reset to 0
    return spike


def _plif_kernel(alpha_ref, x_ref, o_ref, v_ref):
    spike = _plif_step(alpha_ref, x_ref, v_ref, pl.program_id(1))
    o_ref[...] = spike.astype(o_ref.dtype)                  # bf16 spikes (exact 0/1)


def _plif_conv_bn_kernel(alpha_ref, x_ref, w_ref, shift_ref, o_ref, v_ref):
    spike = _plif_step(alpha_ref, x_ref, v_ref, pl.program_id(2))
    acc = jnp.dot(spike.astype(w_ref.dtype), w_ref[...],
                  preferred_element_type=jnp.float32)
    o_ref[...] = (acc + shift_ref[...]).astype(o_ref.dtype)


def _plif_conv_bn_res_kernel(alpha_ref, x_ref, w_ref, shift_ref, r_ref, o_ref, v_ref):
    spike = _plif_step(alpha_ref, x_ref, v_ref, pl.program_id(2))
    acc = jnp.dot(spike.astype(w_ref.dtype), w_ref[...],
                  preferred_element_type=jnp.float32)
    o_ref[...] = (acc + shift_ref[...] + r_ref[...].astype(jnp.float32)
                  ).astype(o_ref.dtype)


# ----------------------------------------------------------------------------
# pallas_call wrappers
# ----------------------------------------------------------------------------
@jax.jit
def matmul_bn(x2d, w2d, shift):
    """Conv-as-matmul with folded BatchNorm. bf16 operands / output, f32 accumulation."""
    M, K = x2d.shape
    Cout = w2d.shape[1]
    tm, tn = _pick_tm(M), _pick_tn(Cout)
    return pl.pallas_call(
        _conv_mm_bn_kernel,
        out_shape=jax.ShapeDtypeStruct((M, Cout), jnp.bfloat16),
        grid=(pl.cdiv(M, tm), pl.cdiv(Cout, tn)),
        in_specs=[
            pl.BlockSpec((tm, K), lambda i, j: (i, 0)),
            pl.BlockSpec((K, tn), lambda i, j: (0, j)),
            pl.BlockSpec((1, tn), lambda i, j: (0, j)),
        ],
        out_specs=pl.BlockSpec((tm, tn), lambda i, j: (i, j)),
        compiler_params=_cparams(("parallel", "parallel")),
        cost_estimate=pl.CostEstimate(
            flops=2 * M * K * Cout, transcendentals=0,
            bytes_accessed=2 * (M * K + K * Cout + M * Cout)),
    )(x2d, w2d, shift)


@jax.jit
def conv3x3_bn_rows(x_pad, w4, shift):
    """3x3 stride-1 conv + folded BN over a padded bf16 NHWC tensor, no im2col in HBM.

    x_pad: [TB, Hp, Wp, C] bf16 -> [TB, Hp-2, Wp-2, Cout] bf16.
    The three vertical taps come from three BlockSpecs on the same array with row
    offsets oh+0 / oh+1 / oh+2; horizontal taps are static sub-window reads in-kernel.
    """
    TB, Hp, Wp, C = x_pad.shape
    Cout = w4.shape[-1]
    Ho, Wo = Hp - 2, Wp - 2

    def row_spec(di):
        return pl.BlockSpec((None, None, Wp, C),
                            lambda tb, oh, d=di: (tb, oh + d, 0, 0))

    return pl.pallas_call(
        _conv3x3_bn_kernel,
        out_shape=jax.ShapeDtypeStruct((TB, Ho, Wo, Cout), jnp.bfloat16),
        grid=(TB, Ho),
        in_specs=[
            row_spec(0), row_spec(1), row_spec(2),
            pl.BlockSpec((3, 3, C, Cout), lambda tb, oh: (0, 0, 0, 0)),
            pl.BlockSpec((1, Cout), lambda tb, oh: (0, 0)),
        ],
        out_specs=pl.BlockSpec((None, None, Wo, Cout), lambda tb, oh: (tb, oh, 0, 0)),
        compiler_params=_cparams(("parallel", "parallel")),
        cost_estimate=pl.CostEstimate(
            flops=2 * TB * Ho * Wo * 9 * C * Cout, transcendentals=0,
            bytes_accessed=2 * (3 * TB * Hp * Wp * C + 9 * C * Cout
                                + TB * Ho * Wo * Cout)),
    )(x_pad, x_pad, x_pad, w4, shift)


@jax.jit
def plif_seq(alpha, x3d):
    """Standalone PLIF. x3d: [T, M, C] bf16 -> bf16 spikes [T, M, C]."""
    T, M, C = x3d.shape
    tm = _pick_tm(M)
    return pl.pallas_call(
        _plif_kernel,
        out_shape=jax.ShapeDtypeStruct((T, M, C), jnp.bfloat16),
        grid=(pl.cdiv(M, tm), T),
        in_specs=[
            pl.BlockSpec(memory_space=pltpu.MemorySpace.SMEM),
            pl.BlockSpec((None, tm, C), lambda m, t: (t, m, 0)),
        ],
        out_specs=pl.BlockSpec((None, tm, C), lambda m, t: (t, m, 0)),
        scratch_shapes=[pltpu.VMEM((tm, C), jnp.float32)],
        compiler_params=_cparams(("parallel", "arbitrary")),
    )(alpha, x3d)


@jax.jit
def plif_conv1x1_bn(alpha, x3d, w, shift):
    """Fused PLIF -> 1x1 conv -> folded BN. x3d: [T, M, Cin] bf16 -> [T, M, Cout] bf16."""
    T, M, Cin = x3d.shape
    Cout = w.shape[1]
    tm, tn = _pick_tm(M), _pick_tn(Cout)
    return pl.pallas_call(
        _plif_conv_bn_kernel,
        out_shape=jax.ShapeDtypeStruct((T, M, Cout), jnp.bfloat16),
        grid=(pl.cdiv(M, tm), pl.cdiv(Cout, tn), T),
        in_specs=[
            pl.BlockSpec(memory_space=pltpu.MemorySpace.SMEM),
            pl.BlockSpec((None, tm, Cin), lambda m, n, t: (t, m, 0)),
            pl.BlockSpec((Cin, tn), lambda m, n, t: (0, n)),
            pl.BlockSpec((1, tn), lambda m, n, t: (0, n)),
        ],
        out_specs=pl.BlockSpec((None, tm, tn), lambda m, n, t: (t, m, n)),
        scratch_shapes=[pltpu.VMEM((tm, Cin), jnp.float32)],
        compiler_params=_cparams(("parallel", "parallel", "arbitrary")),
        cost_estimate=pl.CostEstimate(
            flops=2 * T * M * Cin * Cout, transcendentals=0,
            bytes_accessed=2 * (T * M * Cin + Cin * Cout + T * M * Cout)),
    )(alpha, x3d, w, shift)


@jax.jit
def plif_conv1x1_bn_add(alpha, x3d, w, shift, res3d):
    """Fused PLIF -> 1x1 conv -> BN -> + residual (block epilogue)."""
    T, M, Cin = x3d.shape
    Cout = w.shape[1]
    tm, tn = _pick_tm(M), _pick_tn(Cout)
    return pl.pallas_call(
        _plif_conv_bn_res_kernel,
        out_shape=jax.ShapeDtypeStruct((T, M, Cout), jnp.bfloat16),
        grid=(pl.cdiv(M, tm), pl.cdiv(Cout, tn), T),
        in_specs=[
            pl.BlockSpec(memory_space=pltpu.MemorySpace.SMEM),
            pl.BlockSpec((None, tm, Cin), lambda m, n, t: (t, m, 0)),
            pl.BlockSpec((Cin, tn), lambda m, n, t: (0, n)),
            pl.BlockSpec((1, tn), lambda m, n, t: (0, n)),
            pl.BlockSpec((None, tm, tn), lambda m, n, t: (t, m, n)),
        ],
        out_specs=pl.BlockSpec((None, tm, tn), lambda m, n, t: (t, m, n)),
        scratch_shapes=[pltpu.VMEM((tm, Cin), jnp.float32)],
        compiler_params=_cparams(("parallel", "parallel", "arbitrary")),
        cost_estimate=pl.CostEstimate(
            flops=2 * T * M * Cin * Cout, transcendentals=0,
            bytes_accessed=2 * (T * M * Cin + Cin * Cout + 2 * T * M * Cout)),
    )(alpha, x3d, w, shift, res3d)


# ----------------------------------------------------------------------------
# Layer wrappers (glue)
# ----------------------------------------------------------------------------
def conv_bn(x, p):
    """General conv via im2col + matmul (stem only: 7x7 stride-2, 2-channel input).

    Note: the raw (non-spike) network input is rounded to bf16 here; everywhere else
    operands are exact 0/1 spikes so bf16 is lossless.
    """
    T, N, H, W, C = x.shape
    k, stride, pad = p["k"], p["stride"], p["pad"]
    xb = x.reshape(T * N, H, W, C).astype(jnp.bfloat16)
    if pad > 0:
        xb = jnp.pad(xb, ((0, 0), (pad, pad), (pad, pad), (0, 0)))
    Hp, Wp = H + 2 * pad, W + 2 * pad
    Ho = (Hp - k) // stride + 1
    Wo = (Wp - k) // stride + 1
    if k == 1:
        cols = xb[:, ::stride, ::stride, :][:, :Ho, :Wo, :]
    else:
        patches = []
        for i in range(k):
            for j in range(k):
                patches.append(
                    xb[:, i:i + stride * (Ho - 1) + 1:stride,
                          j:j + stride * (Wo - 1) + 1:stride, :])
        cols = jnp.concatenate(patches, axis=-1)            # (kh, kw, C) patch order
    x2d = cols.reshape(T * N * Ho * Wo, k * k * C)
    Cout = p["w"].shape[1]
    y2d = matmul_bn(x2d, p["w"], p["shift"])
    return y2d.reshape(T, N, Ho, Wo, Cout)


def conv3x3_bn(spikes, p):
    """3x3 stride-1 pad-1 conv + BN over bf16 spikes. No k*k*C im2col in HBM."""
    T, N, H, W, C = spikes.shape
    Cout = p["w"].shape[1]
    w4 = p["w"].reshape(3, 3, C, Cout)                       # same (kh, kw, C) order
    xb = jnp.pad(spikes.reshape(T * N, H, W, C).astype(jnp.bfloat16),
                 ((0, 0), (1, 1), (1, 1), (0, 0)))
    y = conv3x3_bn_rows(xb, w4, p["shift"])
    return y.reshape(T, N, H, W, Cout)


def plif(x, w):
    """Standalone ParametricLIF. x: [T,N,H,W,C] -> bf16 spikes, same shape."""
    T, N, H, W, C = x.shape
    alpha = jax.nn.sigmoid(w).reshape(1).astype(jnp.float32)
    y = plif_seq(alpha, x.reshape(T, N * H * W, C).astype(jnp.bfloat16))
    return y.reshape(T, N, H, W, C)


def fused_plif_conv1x1(x, cp, plif_w, residual=None):
    """PLIF + 1x1 conv + BN (+ residual), one Pallas kernel.

    Spatial sub-sampling for stride>1 is applied BEFORE the PLIF: the neuron is
    element-wise over (N,H,W,C) with recurrence only over T, and positions the
    strided 1x1 conv never reads cannot affect the output, so this is exact.
    """
    T, N, H, W, Cin = x.shape
    s = cp["stride"]
    if s > 1:
        x = x[:, :, ::s, ::s, :]
    Ho, Wo = x.shape[2], x.shape[3]
    Cout = cp["w"].shape[1]
    alpha = jax.nn.sigmoid(plif_w).reshape(1).astype(jnp.float32)
    x3d = x.reshape(T, N * Ho * Wo, Cin).astype(jnp.bfloat16)
    if residual is None:
        y = plif_conv1x1_bn(alpha, x3d, cp["w"], cp["shift"])
    else:
        r3d = residual.reshape(T, N * Ho * Wo, Cout).astype(jnp.bfloat16)
        y = plif_conv1x1_bn_add(alpha, x3d, cp["w"], cp["shift"], r3d)
    return y.reshape(T, N, Ho, Wo, Cout)


def btnk1_fwd(x, p):
    r = fused_plif_conv1x1(x, p["conv_r"], p["plif_r"])           # res branch
    s = fused_plif_conv1x1(x, p["conv0"], p["plif0"])             # stem 1x1
    s = conv3x3_bn(plif(s, p["plif1"]), p["conv1"])               # stem 3x3
    return fused_plif_conv1x1(s, p["conv2"], p["plif2"], residual=r)


def btnk2_fwd(x, p):
    s = fused_plif_conv1x1(x, p["conv0"], p["plif0"])
    s = conv3x3_bn(plif(s, p["plif1"]), p["conv1"])
    return fused_plif_conv1x1(s, p["conv2"], p["plif2"], residual=x)


def run_stage(x, blocks):
    for kind, p in blocks:
        x = btnk1_fwd(x, p) if kind == "b1" else btnk2_fwd(x, p)
    return x


# ----------------------------------------------------------------------------
# Deterministic parameter init (shapes from NewSpikingResNet.__init__)
# ----------------------------------------------------------------------------
def init_conv_bn(key, cin, cout, k, stride, pad):
    k1, k2, k3, k4, k5, k6 = jax.random.split(key, 6)
    fan_in = cin * k * k
    w = jax.random.normal(k1, (k, k, cin, cout), jnp.float32) / math.sqrt(fan_in)
    b = 0.01 * jax.random.normal(k2, (cout,), jnp.float32)        # conv bias
    gamma = 1.0 + 0.1 * jax.random.normal(k3, (cout,), jnp.float32)
    beta = 0.01 * jax.random.normal(k4, (cout,), jnp.float32)
    rmean = 0.01 * jax.random.normal(k5, (cout,), jnp.float32)
    rvar = 0.5 + jax.random.uniform(k6, (cout,), jnp.float32)
    scale = gamma / jnp.sqrt(rvar + 1e-5)                          # BN scale
    shift = (b - rmean) * scale + beta
    # Fold BN scale into the weight columns in f32, then cast once to bf16.
    w_folded = (w * scale).reshape(k * k * cin, cout)
    return {"w": w_folded.astype(jnp.bfloat16),
            "shift": shift.reshape(1, cout).astype(jnp.float32),
            "k": k, "stride": stride, "pad": pad}


def init_plif():
    # spikingjelly ParametricLIFNode default init_tau=2.0 -> w = -log(tau-1) = 0
    return jnp.zeros((1,), jnp.float32)


def init_btnk1(key, cin, cout, stride):
    ks = jax.random.split(key, 4)
    return {
        "plif0": init_plif(), "conv0": init_conv_bn(ks[0], cin, cout, 1, stride, 0),
        "plif1": init_plif(), "conv1": init_conv_bn(ks[1], cout, cout, 3, 1, 1),
        "plif2": init_plif(), "conv2": init_conv_bn(ks[2], cout, 4 * cout, 1, 1, 0),
        "plif_r": init_plif(), "conv_r": init_conv_bn(ks[3], cin, 4 * cout, 1, stride, 0),
    }


def init_btnk2(key, ch):
    ks = jax.random.split(key, 3)
    return {
        "plif0": init_plif(), "conv0": init_conv_bn(ks[0], ch, ch // 4, 1, 1, 0),
        "plif1": init_plif(), "conv1": init_conv_bn(ks[1], ch // 4, ch // 4, 3, 1, 1),
        "plif2": init_plif(), "conv2": init_conv_bn(ks[2], ch // 4, ch, 1, 1, 0),
    }


def init_params(key):
    keys = jax.random.split(key, 32)
    it = iter(keys)
    params = {}
    params["stage0"] = init_conv_bn(next(it), 2, 64, 7, 2, 0)
    params["stage1"] = ([("b1", init_btnk1(next(it), 64, 64, 1))]
                        + [("b2", init_btnk2(next(it), 256)) for _ in range(2)])
    params["stage2"] = ([("b1", init_btnk1(next(it), 256, 128, 2))]
                        + [("b2", init_btnk2(next(it), 512)) for _ in range(3)])
    params["stage3"] = ([("b1", init_btnk1(next(it), 512, 256, 2))]
                        + [("b2", init_btnk2(next(it), 1024)) for _ in range(5)])
    params["stage4"] = ([("b1", init_btnk1(next(it), 1024, 512, 2))]
                        + [("b2", init_btnk2(next(it), 2048)) for _ in range(2)])
    return params


# ----------------------------------------------------------------------------
# Full forward (mirrors NewSpikingResNet.forward)
# ----------------------------------------------------------------------------
def nearest_resize_bool(m, size):
    """m: [N, Hm, Wm] bool -> [N, h, w] bool (F.interpolate mode='nearest')."""
    _, Hm, Wm = m.shape
    h, w = size
    ri = jnp.floor(jnp.arange(h) * (Hm / h)).astype(jnp.int32)
    ci = jnp.floor(jnp.arange(w) * (Wm / w)).astype(jnp.int32)
    return m[:, ri][:, :, ci]


def make_masks(m, size, T):
    # PyTorch appends T identical copies of interpolate(m[0][None], size)[0].
    m0 = nearest_resize_bool(m[0], size)       # [N, h, w]
    return jnp.stack([m0] * T, axis=0)         # [T, N, h, w]


def to_nchw(x):
    return jnp.transpose(x, (0, 1, 4, 2, 3))   # [T, N, H, W, C] -> [T, N, C, H, W]


def new_spiking_resnet_forward(params, xs_nchw, mask):
    """xs_nchw: [T, N, 2, H, W] float32; mask: [T, N, H, W] bool."""
    T = xs_nchw.shape[0]
    x = jnp.transpose(xs_nchw, (0, 1, 3, 4, 2)).astype(jnp.float32)  # -> NHWC
    out = {}
    x = conv_bn(x, params["stage0"])
    x = run_stage(x, params["stage1"])
    out["layer1"] = (to_nchw(x).astype(jnp.float32), make_masks(mask, x.shape[2:4], T))
    x = run_stage(x, params["stage2"])
    out["layer2"] = (to_nchw(x).astype(jnp.float32), make_masks(mask, x.shape[2:4], T))
    x = run_stage(x, params["stage3"])
    out["layer3"] = (to_nchw(x).astype(jnp.float32), make_masks(mask, x.shape[2:4], T))
    x = run_stage(x, params["stage4"])
    out["layer4"] = (to_nchw(x).astype(jnp.float32), make_masks(mask, x.shape[2:4], T))
    return out


# ----------------------------------------------------------------------------
if __name__ == "__main__":
    key = jax.random.PRNGKey(0)
    kx, km, kp = jax.random.split(key, 3)

    # Small shapes: T=2 time steps, batch N=1, 2 input channels, 32x32 spatial.
    T, N, H, W = 2, 1, 32, 32
    x = jax.random.normal(kx, (T, N, 2, H, W), jnp.float32)
    mask = jax.random.uniform(km, (T, N, H, W)) > 0.5

    params = init_params(kp)

    out = new_spiking_resnet_forward(params, x, mask)
    jax.block_until_ready(out)

    # Sanity: expected spatial pyramid 13 -> 7 -> 4 -> 2, channels 256/512/1024/2048.
    assert out["layer1"][0].shape == (T, N, 256, 13, 13)
    assert out["layer2"][0].shape == (T, N, 512, 7, 7)
    assert out["layer3"][0].shape == (T, N, 1024, 4, 4)
    assert out["layer4"][0].shape == (T, N, 2048, 2, 2)
    assert out["layer4"][1].shape == (T, N, 2, 2)

    print("KERNEL_OK")
</pallas_src>

<mosaic_0001>
module attributes {stable_mosaic.version = 11 : i64} {
  func.func @_conv_mm_bn_kernel(%arg0: i32, %arg1: i32, %arg2: memref<338x98xbf16, #tpu.memory_space<vmem>>, %arg3: memref<98x64xbf16, #tpu.memory_space<vmem>>, %arg4: memref<1x64xf32, #tpu.memory_space<vmem>>, %arg5: memref<338x64xbf16, #tpu.memory_space<vmem>>) attributes {dimension_semantics = [#tpu.dimension_semantics<parallel>, #tpu.dimension_semantics<parallel>], iteration_bounds = array<i64: 1, 1>, scalar_prefetch = 0 : i64, scratch_operands = 0 : i64, tpu.core_type = #tpu.core_type<tc>, window_params = [{transform_indices = @transform_0, window_bounds = array<i64: 338, 98>}, {transform_indices = @transform_1, window_bounds = array<i64: 98, 64>}, {transform_indices = @transform_2, window_bounds = array<i64: 1, 64>}, {transform_indices = @transform_3, window_bounds = array<i64: 338, 64>}]} {
    %c0 = arith.constant 0 : index
    %c0_0 = arith.constant 0 : index
    %0 = vector.load %arg2[%c0, %c0_0] : memref<338x98xbf16, #tpu.memory_space<vmem>>, vector<338x98xbf16>
    %c0_1 = arith.constant 0 : index
    %c0_2 = arith.constant 0 : index
    %1 = vector.load %arg3[%c0_1, %c0_2] : memref<98x64xbf16, #tpu.memory_space<vmem>>, vector<98x64xbf16>
    %cst = arith.constant dense<0.000000e+00> : vector<338x64xf32>
    %2 = tpu.matmul %0, %1, %cst {dimension_numbers = #tpu.dot_dimension_numbers<[1], [0], [0], [1], [0, 0, 1, 1], [], []>} : vector<338x98xbf16>, vector<98x64xbf16>, vector<338x64xf32> -> vector<338x64xf32>
    %c0_3 = arith.constant 0 : index
    %c0_4 = arith.constant 0 : index
    %3 = vector.load %arg4[%c0_3, %c0_4] : memref<1x64xf32, #tpu.memory_space<vmem>>, vector<1x64xf32>
    %4 = vector.broadcast %3 : vector<1x64xf32> to vector<338x64xf32>
    %5 = arith.addf %2, %4 : vector<338x64xf32>
    %6 = arith.truncf %5 : vector<338x64xf32> to vector<338x64xbf16>
    %c0_5 = arith.constant 0 : index
    %c0_6 = arith.constant 0 : index
    %7 = vector.load %arg5[%c0_5, %c0_6] : memref<338x64xbf16, #tpu.memory_space<vmem>>, vector<338x64xbf16>
    tpu.vector_store %arg5[%c0_5, %c0_6], %6 {strides = array<i32>} : memref<338x64xbf16, #tpu.memory_space<vmem>>, vector<338x64xbf16>,
    return
  }
  func.func @transform_0(%arg0: i32, %arg1: i32) -> (i32, i32) {
    %c0_i32 = arith.constant 0 : i32
    %c0_i32_0 = arith.constant 0 : i32
    return %arg0, %c0_i32 : i32, i32
  }
  func.func @transform_1(%arg0: i32, %arg1: i32) -> (i32, i32) {
    %c0_i32 = arith.constant 0 : i32
    %c0_i32_0 = arith.constant 0 : i32
    return %c0_i32, %arg1 : i32, i32
  }
  func.func @transform_2(%arg0: i32, %arg1: i32) -> (i32, i32) {
    %c0_i32 = arith.constant 0 : i32
    %c0_i32_0 = arith.constant 0 : i32
    return %c0_i32, %arg1 : i32, i32
  }
  func.func @transform_3(%arg0: i32, %arg1: i32) -> (i32, i32) {
    %c0_i32 = arith.constant 0 : i32
    return %arg0, %arg1 : i32, i32
  }
}

</mosaic_0001>

<llo_original>
// kernel: matmul_bn.1
$region0: #{matmul_bn.1}
  #allocation0 [shape = 'u32[]', space=smem, size = 0x4, offset = 0x4, fixed_abs, tag = 'smem constant byte address 0x4 - core index']
  #allocation1 [shape = 'u32[144,128]{1,0:T(1,128)}', space=vmem, size = 0x12000, scoped, tag = 'internal scratch']
  %s0 = inlined_call_operand.vmem [shape: bf16[338,98], index: 0, kind: input, shape index: {}]
  %s1 = inlined_call_operand.vmem [shape: bf16[98,64], index: 1, kind: input, shape index: {}]
  %s2 = inlined_call_operand.vmem [shape: f32[1,64], index: 2, kind: input, shape index: {}]
  %s3 = inlined_call_operand.vmem [shape: bf16[338,64], index: 3, kind: output, shape index: {}]
  %s4 = sld [smem:[#allocation0]]
  $region22: #{matmul_bn.1} parent=0
    _
  %s6 = ssub.s32 1, %s4
  %s7 = scalar_select 0, %s6, %s4
  // Predicated region
  $region2: #{matmul_bn.1} parent=0 // pred_check
    _
  $region3: #{matmul_bn.1} parent=0 // pred_check_branch
    %9 = sbr.rel (0) target = $region5
  $region4: #{matmul_bn.1} parent=0 // pred_region
    _
  $region5: #{matmul_bn.1} parent=0 // pred_fallthru
    _
  // Predicated region
  $region6: #{matmul_bn.1} parent=0 // pred_check
    _
  $region7: #{matmul_bn.1} parent=0 // pred_check_branch
    %11 = sbr.rel (0) target = $region9
  $region8: #{matmul_bn.1} parent=0 // pred_region
    _
  $region9: #{matmul_bn.1} parent=0 // pred_fallthru
    _
  // Predicated region
  $region10: #{matmul_bn.1} parent=0 // pred_check
    _
  $region11: #{matmul_bn.1} parent=0 // pred_check_branch
    %13 = sbr.rel (0) target = $region13
  $region12: #{matmul_bn.1} parent=0 // pred_region
    _
  $region13: #{matmul_bn.1} parent=0 // pred_fallthru
    _
  %v15 = vld [vmem:[%s0] sm:$0xf]
  %v16 = vld [vmem:[%s0 + $0x4] sm:$0xf]
  %v17 = vld [vmem:[%s0 + $0x8] sm:$0xf]
  %v18 = vld [vmem:[%s0 + $0xc] sm:$0xf]
  %v19 = vld [vmem:[%s0 + $0x10] sm:$0xf]
  %v20 = vld [vmem:[%s0 + $0x14] sm:$0xf]
  %v21 = vld [vmem:[%s0 + $0x18] sm:$0xf]
  %v22 = vld [vmem:[%s0 + $0x1c] sm:$0xf]
  %v23 = vld [vmem:[%s0 + $0x20] sm:$0xf]
  %v24 = vld [vmem:[%s0 + $0x24] sm:$0xf]
  %v25 = vld [vmem:[%s0 + $0x28] sm:$0xf]
  %v26 = vld [vmem:[%s0 + $0x2c] sm:$0xf]
  %v27 = vld [vmem:[%s0 + $0x30] sm:$0xf]
  %v28 = vld [vmem:[%s0 + $0x34] sm:$0xf]
  %v29 = vld [vmem:[%s0 + $0x38] sm:$0xf]
  %v30 = vld [vmem:[%s0 + $0x3c] sm:$0xf]
  %v31 = vld [vmem:[%s0 + $0x40] sm:$0xf]
  %v32 = vld [vmem:[%s0 + $0x44] sm:$0xf]
  %v33 = vld [vmem:[%s0 + $0x48] sm:$0xf]
  %v34 = vld [vmem:[%s0 + $0x4c] sm:$0xf]
  %v35 = vld [vmem:[%s0 + $0x50] sm:$0xf]
  %v36 = vld [vmem:[%s0 + $0x54] sm:$0xf]
  %v37 = vld [vmem:[%s0 + $0x58] sm:$0xf]
  %v38 = vld [vmem:[%s0 + $0x5c] sm:$0xf]
  %v39 = vld [vmem:[%s0 + $0x60] sm:$0xf]
  %v40 = vld [vmem:[%s0 + $0x64] sm:$0xf]
  %v41 = vld [vmem:[%s0 + $0x68] sm:$0xf]
  %v42 = vld [vmem:[%s0 + $0x6c] sm:$0xf]
  %v43 = vld [vmem:[%s0 + $0x70] sm:$0xf]
  %v44 = vld [vmem:[%s0 + $0x74] sm:$0xf]
  %v45 = vld [vmem:[%s0 + $0x78] sm:$0xf]
  %v46 = vld [vmem:[%s0 + $0x7c] sm:$0xf]
  %v47 = vld [vmem:[%s0 + $0x80] sm:$0xf]
  %v48 = vld [vmem:[%s0 + $0x84] sm:$0xf]
  %v49 = vld [vmem:[%s0 + $0x88] sm:$0xf]
  %v50 = vld [vmem:[%s0 + $0x8c] sm:$0xf]
  %v51 = vld [vmem:[%s0 + $0x90] sm:$0xf]
  %v52 = vld [vmem:[%s0 + $0x94] sm:$0xf]
  %v53 = vld [vmem:[%s0 + $0x98] sm:$0xf]
  %v54 = vld [vmem:[%s0 + $0x9c] sm:$0xf]
  %v55 = vld [vmem:[%s0 + $0xa0] sm:$0xf]
  %v56 = vld [vmem:[%s0 + $0xa4] sm:$0xf]
  %v57 = vld [vmem:[%s0 + $0xa8] sm:$0x1]
  %v58 = vld [vmem:[%s1] sm:$0xf]
  %v59 = vld [vmem:[%s1 + $0x4] sm:$0xf]
  %v60 = vld [vmem:[%s1 + $0x8] sm:$0xf]
  %v61 = vld [vmem:[%s1 + $0xc] sm:$0xf]
  %v62 = vld [vmem:[%s1 + $0x10] sm:$0xf]
  %v63 = vld [vmem:[%s1 + $0x14] sm:$0xf]
  %v64 = vld [vmem:[%s1 + $0x18] sm:$0xf]
  %v65 = vld [vmem:[%s1 + $0x1c] sm:$0xf]
  %v66 = vld [vmem:[%s1 + $0x20] sm:$0xf]
  %v67 = vld [vmem:[%s1 + $0x24] sm:$0xf]
  %v68 = vld [vmem:[%s1 + $0x28] sm:$0xf]
  %v69 = vld [vmem:[%s1 + $0x2c] sm:$0xf]
  %v70 = vld [vmem:[%s1 + $0x30] sm:$0x1]
  %v71 = vld [vmem:[%s2] sm:$0x1]
  %v73 = vlaneseq
  %v74 = vshrl.u32 %v73, 7
  %v75 = vsub.s32 0, %v74
  %v76 = vrot.slane %v71, %v75
  %v121 = vunpack.c.l.b16 %v15
  %v122 = vunpack.c.l.b16 %v16
  %v123 = vunpack.c.l.b16 %v17
  %v124 = vunpack.c.l.b16 %v18
  %v125 = vunpack.c.l.b16 %v19
  %v126 = vunpack.c.l.b16 %v20
  %v127 = vunpack.c.l.b16 %v21
  %v128 = vunpack.c.l.b16 %v22
  %v129 = vunpack.c.l.b16 %v23
  %v130 = vunpack.c.l.b16 %v24
  %v131 = vunpack.c.l.b16 %v25
  %v132 = vunpack.c.l.b16 %v26
  %v133 = vunpack.c.l.b16 %v27
  %v134 = vunpack.c.l.b16 %v28
  %v135 = vunpack.c.l.b16 %v29
  %v136 = vunpack.c.l.b16 %v30
  %v137 = vunpack.c.l.b16 %v31
  %v138 = vunpack.c.l.b16 %v32
  %v139 = vunpack.c.l.b16 %v33
  %v140 = vunpack.c.l.b16 %v34
  %v141 = vunpack.c.l.b16 %v35
  %v142 = vunpack.c.l.b16 %v36
  %v143 = vunpack.c.l.b16 %v37
  %v144 = vunpack.c.l.b16 %v38
  %v145 = vunpack.c.l.b16 %v39
  %v146 = vunpack.c.l.b16 %v40
  %v147 = vunpack.c.l.b16 %v41
  %v148 = vunpack.c.l.b16 %v42
  %v149 = vunpack.c.l.b16 %v43
  %v150 = vunpack.c.l.b16 %v44
  %v151 = vunpack.c.l.b16 %v45
  %v152 = vunpack.c.l.b16 %v46
  %v153 = vunpack.c.l.b16 %v47
  %v154 = vunpack.c.l.b16 %v48
  %v155 = vunpack.c.l.b16 %v49
  %v156 = vunpack.c.l.b16 %v50
  %v157 = vunpack.c.l.b16 %v51
  %v158 = vunpack.c.l.b16 %v52
  %v159 = vunpack.c.l.b16 %v53
  %v160 = vunpack.c.l.b16 %v54
  %v161 = vunpack.c.l.b16 %v55
  %v162 = vunpack.c.l.b16 %v56
  %v163 = vunpack.c.l.b16 %v57
  %v164 = vpack.c.b16 %v122, %v121
  %v165 = vpack.c.b16 %v124, %v123
  %v166 = vpack.c.b16 %v126, %v125
  %v167 = vpack.c.b16 %v128, %v127
  %v168 = vpack.c.b16 %v130, %v129
  %v169 = vpack.c.b16 %v132, %v131
  %v170 = vpack.c.b16 %v134, %v133
  %v171 = vpack.c.b16 %v136, %v135
  %v172 = vpack.c.b16 %v138, %v137
  %v173 = vpack.c.b16 %v140, %v139
  %v174 = vpack.c.b16 %v142, %v141
  %v175 = vpack.c.b16 %v144, %v143
  %v176 = vpack.c.b16 %v146, %v145
  %v177 = vpack.c.b16 %v148, %v147
  %v178 = vpack.c.b16 %v150, %v149
  %v179 = vpack.c.b16 %v152, %v151
  %v180 = vpack.c.b16 %v154, %v153
  %v181 = vpack.c.b16 %v156, %v155
  %v182 = vpack.c.b16 %v158, %v157
  %v183 = vpack.c.b16 %v160, %v159
  %v184 = vpack.c.b16 %v162, %v161
  %v185 = vpack.c.b16 %v163, %v163
  %v199 = vunpack.c.l.b16 %v58
  %v200 = vunpack.c.l.b16 %v59
  %v201 = vunpack.c.l.b16 %v60
  %v202 = vunpack.c.l.b16 %v61
  %v203 = vunpack.c.l.b16 %v62
  %v204 = vunpack.c.l.b16 %v63
  %v205 = vunpack.c.l.b16 %v64
  %v206 = vunpack.c.l.b16 %v65
  %v207 = vunpack.c.l.b16 %v66
  %v208 = vunpack.c.l.b16 %v67
  %v209 = vunpack.c.l.b16 %v68
  %v210 = vunpack.c.l.b16 %v69
  %v211 = vunpack.c.l.b16 %v70
  %v212 = vpack.c.b16 %v200, %v199
  %v213 = vpack.c.b16 %v202, %v201
  %v214 = vpack.c.b16 %v204, %v203
  %v215 = vpack.c.b16 %v206, %v205
  %v216 = vpack.c.b16 %v208, %v207
  %v217 = vpack.c.b16 %v210, %v209
  %v218 = vpack.c.b16 %v211, %v211
  %vm225 = vcmask 801792
  %v227 = vsel %vm225, %v164, 0
  %v230 = vsel %vm225, %v165, 0
  %v233 = vsel %vm225, %v166, 0
  %v236 = vsel %vm225, %v167, 0
  %v239 = vsel %vm225, %v168, 0
  %v242 = vsel %vm225, %v169, 0
  %v245 = vsel %vm225, %v170, 0
  %v248 = vsel %vm225, %v171, 0
  %v251 = vsel %vm225, %v172, 0
  %v254 = vsel %vm225, %v173, 0
  %v257 = vsel %vm225, %v174, 0
  %v260 = vsel %vm225, %v175, 0
  %v263 = vsel %vm225, %v176, 0
  %v266 = vsel %vm225, %v177, 0
  %v269 = vsel %vm225, %v178, 0
  %v272 = vsel %vm225, %v179, 0
  %v275 = vsel %vm225, %v180, 0
  %v278 = vsel %vm225, %v181, 0
  %v281 = vsel %vm225, %v182, 0
  %v284 = vsel %vm225, %v183, 0
  %v287 = vsel %vm225, %v184, 0
  %v290 = vsel %vm225, %v185, 0
  %vm292 = vcmask 1040384
  %v294 = vsel %vm292, %v218, 0
  %296 = vmatprep.subr.bf16.mxu0 0
  %297 = vmatpush1.bf16.msra.mxu0 0
  %298 = vmatprep.subr.bf16.mxu0 0
  %299 = vmatpush1.bf16.msra.mxu0 %v294
  %300 = vmatprep.subr.bf16.mxu0 0
  %301 = vmatpush1.bf16.msra.mxu0 %v217
  %302 = vmatprep.subr.bf16.mxu0 0
  %303 = vmatpush1.bf16.msra.mxu0 %v216
  %304 = vmatprep.subr.bf16.mxu0 0
  %305 = vmatpush1.bf16.msra.mxu0 %v215
  %306 = vmatprep.subr.bf16.mxu0 0
  %307 = vmatpush1.bf16.msra.mxu0 %v214
  %308 = vmatprep.subr.bf16.mxu0 0
  %309 = vmatpush1.bf16.msra.mxu0 %v213
  %310 = vmatprep.subr.bf16.mxu0 0
  %311 = vmatpush1.bf16.msra.mxu0 %v212
  %312 = vmatprep.subr.bf16.mxu0 0
  %313 = vmatpush2.bf16.msra.mxu0 0
  %314 = vmatprep.subr.bf16.mxu0 0
  %315 = vmatpush2.bf16.msra.mxu0 0
  %316 = vmatprep.subr.bf16.mxu0 0
  %317 = vmatpush2.bf16.msra.mxu0 0
  %318 = vmatprep.subr.bf16.mxu0 0
  %319 = vmatpush2.bf16.msra.mxu0 0
  %320 = vmatprep.subr.bf16.mxu0 0
  %321 = vmatpush2.bf16.msra.mxu0 0
  %322 = vmatprep.subr.bf16.mxu0 0
  %323 = vmatpush2.bf16.msra.mxu0 0
  %324 = vmatprep.subr.bf16.mxu0 0
  %325 = vmatpush2.bf16.msra.mxu0 0
  %326 = vmatprep.subr.bf16.mxu0 0
  %327 = vmatpush2.bf16.msra.mxu0 0
  %328 = vmatprep.mubr.bf16.mxu0 0
  %329 = vmatmul.mubr.bf16.gmra.mxu0 %v227
  %v330 = vpop.f32.mrf.mxu0
  %v331 = vadd.f32 %v76, %v330
  %v332 = vpop.f32.mrf.mxu0
  %v333 = vpop.f32.mrf.mxu0
  %v334 = vadd.f32 %v76, %v333
  %v335 = vpop.f32.mrf.mxu0
  %336 = vmatprep.mubr.bf16.mxu0 0
  %337 = vmatmul.mubr.bf16.gmra.mxu0 %v230
  %v338 = vpop.f32.mrf.mxu0
  %v339 = vadd.f32 %v76, %v338
  %v340 = vpop.f32.mrf.mxu0
  %v341 = vpop.f32.mrf.mxu0
  %v342 = vadd.f32 %v76, %v341
  %v343 = vpop.f32.mrf.mxu0
  %344 = vmatprep.mubr.bf16.mxu0 0
  %345 = vmatmul.mubr.bf16.gmra.mxu0 %v233
  %v346 = vpop.f32.mrf.mxu0
  %v347 = vadd.f32 %v76, %v346
  %v348 = vpop.f32.mrf.mxu0
  %v349 = vpop.f32.mrf.mxu0
  %v350 = vadd.f32 %v76, %v349
  %v351 = vpop.f32.mrf.mxu0
  %352 = vmatprep.mubr.bf16.mxu0 0
  %353 = vmatmul.mubr.bf16.gmra.mxu0 %v236
  %v354 = vpop.f32.mrf.mxu0
  %v355 = vadd.f32 %v76, %v354
  %v356 = vpop.f32.mrf.mxu0
  %v357 = vpop.f32.mrf.mxu0
  %v358 = vadd.f32 %v76, %v357
  %v359 = vpop.f32.mrf.mxu0
  %360 = vmatprep.mubr.bf16.mxu0 0
  %361 = vmatmul.mubr.bf16.gmra.mxu0 %v239
  %v362 = vpop.f32.mrf.mxu0
  %v363 = vadd.f32 %v76, %v362
  %v364 = vpop.f32.mrf.mxu0
  %v365 = vpop.f32.mrf.mxu0
  %v366 = vadd.f32 %v76, %v365
  %v367 = vpop.f32.mrf.mxu0
  %368 = vmatprep.mubr.bf16.mxu0 0
  %369 = vmatmul.mubr.bf16.gmra.mxu0 %v242
  %v370 = vpop.f32.mrf.mxu0
  %v371 = vadd.f32 %v76, %v370
  %v372 = vpop.f32.mrf.mxu0
  %v373 = vpop.f32.mrf.mxu0
  %v374 = vadd.f32 %v76, %v373
  %v375 = vpop.f32.mrf.mxu0
  %376 = vmatprep.mubr.bf16.mxu0 0
  %377 = vmatmul.mubr.bf16.gmra.mxu0 %v245
  %v378 = vpop.f32.mrf.mxu0
  %v379 = vadd.f32 %v76, %v378
  %v380 = vpop.f32.mrf.mxu0
  %v381 = vpop.f32.mrf.mxu0
  %v382 = vadd.f32 %v76, %v381
  %v383 = vpop.f32.mrf.mxu0
  %384 = vmatprep.mubr.bf16.mxu0 0
  %385 = vmatmul.mubr.bf16.gmra.mxu0 %v248
  %v386 = vpop.f32.mrf.mxu0
  %v387 = vadd.f32 %v76, %v386
  %v388 = vpop.f32.mrf.mxu0
  %v389 = vpop.f32.mrf.mxu0
  %v390 = vadd.f32 %v76, %v389
  %v391 = vpop.f32.mrf.mxu0
  %392 = vmatprep.mubr.bf16.mxu0 0
  %393 = vmatmul.mubr.bf16.gmra.mxu0 %v251
  %v394 = vpop.f32.mrf.mxu0
  %v395 = vadd.f32 %v76, %v394
  %v396 = vpop.f32.mrf.mxu0
  %v397 = vpop.f32.mrf.mxu0
  %v398 = vadd.f32 %v76, %v397
  %v399 = vpop.f32.mrf.mxu0
  %400 = vmatprep.mubr.bf16.mxu0 0
  %401 = vmatmul.mubr.bf16.gmra.mxu0 %v254
  %v402 = vpop.f32.mrf.mxu0
  %v403 = vadd.f32 %v76, %v402
  %v404 = vpop.f32.mrf.mxu0
  %v405 = vpop.f32.mrf.mxu0
  %v406 = vadd.f32 %v76, %v405
  %v407 = vpop.f32.mrf.mxu0
  %408 = vmatprep.mubr.bf16.mxu0 0
  %409 = vmatmul.mubr.bf16.gmra.mxu0 %v257
  %v410 = vpop.f32.mrf.mxu0
  %v411 = vadd.f32 %v76, %v410
  %v412 = vpop.f32.mrf.mxu0
  %v413 = vpop.f32.mrf.mxu0
  %v414 = vadd.f32 %v76, %v413
  %v415 = vpop.f32.mrf.mxu0
  %416 = vmatprep.mubr.bf16.mxu0 0
  %417 = vmatmul.mubr.bf16.gmra.mxu0 %v260
  %v418 = vpop.f32.mrf.mxu0
  %v419 = vadd.f32 %v76, %v418
  %v420 = vpop.f32.mrf.mxu0
  %v421 = vpop.f32.mrf.mxu0
  %v422 = vadd.f32 %v76, %v421
  %v423 = vpop.f32.mrf.mxu0
  %424 = vmatprep.mubr.bf16.mxu0 0
  %425 = vmatmul.mubr.bf16.gmra.mxu0 %v263
  %v426 = vpop.f32.mrf.mxu0
  %v427 = vadd.f32 %v76, %v426
  %v428 = vpop.f32.mrf.mxu0
  %v429 = vpop.f32.mrf.mxu0
  %v430 = vadd.f32 %v76, %v429
  %v431 = vpop.f32.mrf.mxu0
  %432 = vmatprep.mubr.bf16.mxu0 0
  %433 = vmatmul.mubr.bf16.gmra.mxu0 %v266
  %v434 = vpop.f32.mrf.mxu0
  %v435 = vadd.f32 %v76, %v434
  %v436 = vpop.f32.mrf.mxu0
  %v437 = vpop.f32.mrf.mxu0
  %v438 = vadd.f32 %v76, %v437
  %v439 = vpop.f32.mrf.mxu0
  %440 = vmatprep.mubr.bf16.mxu0 0
  %441 = vmatmul.mubr.bf16.gmra.mxu0 %v269
  %v442 = vpop.f32.mrf.mxu0
  %v443 = vadd.f32 %v76, %v442
  %v444 = vpop.f32.mrf.mxu0
  %v445 = vpop.f32.mrf.mxu0
  %v446 = vadd.f32 %v76, %v445
  %v447 = vpop.f32.mrf.mxu0
  %448 = vmatprep.mubr.bf16.mxu0 0
  %449 = vmatmul.mubr.bf16.gmra.mxu0 %v272
  %v450 = vpop.f32.mrf.mxu0
  %v451 = vadd.f32 %v76, %v450
  %v452 = vpop.f32.mrf.mxu0
  %v453 = vpop.f32.mrf.mxu0
  %v454 = vadd.f32 %v76, %v453
  %v455 = vpop.f32.mrf.mxu0
  %456 = vmatprep.mubr.bf16.mxu0 0
  %457 = vmatmul.mubr.bf16.gmra.mxu0 %v275
  %v458 = vpop.f32.mrf.mxu0
  %v459 = vadd.f32 %v76, %v458
  %v460 = vpop.f32.mrf.mxu0
  %v461 = vpop.f32.mrf.mxu0
  %v462 = vadd.f32 %v76, %v461
  %v463 = vpop.f32.mrf.mxu0
  %464 = vmatprep.mubr.bf16.mxu0 0
  %465 = vmatmul.mubr.bf16.gmra.mxu0 %v278
  %v466 = vpop.f32.mrf.mxu0
  %v467 = vadd.f32 %v76, %v466
  %v468 = vpop.f32.mrf.mxu0
  %v469 = vpop.f32.mrf.mxu0
  %v470 = vadd.f32 %v76, %v469
  %v471 = vpop.f32.mrf.mxu0
  %472 = vmatprep.mubr.bf16.mxu0 0
  %473 = vmatmul.mubr.bf16.gmra.mxu0 %v281
  %v474 = vpop.f32.mrf.mxu0
  %v475 = vadd.f32 %v76, %v474
  %v476 = vpop.f32.mrf.mxu0
  %v477 = vpop.f32.mrf.mxu0
  %v478 = vadd.f32 %v76, %v477
  %v479 = vpop.f32.mrf.mxu0
  %480 = vmatprep.mubr.bf16.mxu0 0
  %481 = vmatmul.mubr.bf16.gmra.mxu0 %v284
  %v482 = vpop.f32.mrf.mxu0
  %v483 = vadd.f32 %v76, %v482
  %v484 = vpop.f32.mrf.mxu0
  %v485 = vpop.f32.mrf.mxu0
  %v486 = vadd.f32 %v76, %v485
  %v487 = vpop.f32.mrf.mxu0
  %488 = vmatprep.mubr.bf16.mxu0 0
  %489 = vmatmul.mubr.bf16.gmra.mxu0 %v287
  %v490 = vpop.f32.mrf.mxu0
  %v491 = vadd.f32 %v76, %v490
  %v492 = vpop.f32.mrf.mxu0
  %v493 = vpop.f32.mrf.mxu0
  %v494 = vadd.f32 %v76, %v493
  %v495 = vpop.f32.mrf.mxu0
  %496 = vmatprep.mubr.bf16.mxu0 0
  %497 = vmatmul.mubr.bf16.gmra.mxu0 %v290
  %v498 = vpop.f32.mrf.mxu0
  %v499 = vadd.f32 %v76, %v498
  %v500 = vpop.f32.mrf.mxu0
  %v501 = vpop.f32.mrf.mxu0
  %v502 = vpop.f32.mrf.mxu0
  %503 = vdwg.mxu0
  %v504 = vpack.c.bf16 %v334, %v331
  %v505 = vpack.c.bf16 %v342, %v339
  %v506 = vpack.c.bf16 %v350, %v347
  %v507 = vpack.c.bf16 %v358, %v355
  %v508 = vpack.c.bf16 %v366, %v363
  %v509 = vpack.c.bf16 %v374, %v371
  %v510 = vpack.c.bf16 %v382, %v379
  %v511 = vpack.c.bf16 %v390, %v387
  %v512 = vpack.c.bf16 %v398, %v395
  %v513 = vpack.c.bf16 %v406, %v403
  %v514 = vpack.c.bf16 %v414, %v411
  %v515 = vpack.c.bf16 %v422, %v419
  %v516 = vpack.c.bf16 %v430, %v427
  %v517 = vpack.c.bf16 %v438, %v435
  %v518 = vpack.c.bf16 %v446, %v443
  %v519 = vpack.c.bf16 %v454, %v451
  %v520 = vpack.c.bf16 %v462, %v459
  %v521 = vpack.c.bf16 %v470, %v467
  %v522 = vpack.c.bf16 %v478, %v475
  %v523 = vpack.c.bf16 %v486, %v483
  %v524 = vpack.c.bf16 %v494, %v491
  %v525 = vpack.c.bf16 %v499, %v499
  %v548 = vunpack.c.l.b16 %v504
  %v549 = vunpack.c.h.b16 %v504
  %v550 = vunpack.c.l.b16 %v505
  %v551 = vunpack.c.h.b16 %v505
  %v552 = vunpack.c.l.b16 %v506
  %v553 = vunpack.c.h.b16 %v506
  %v554 = vunpack.c.l.b16 %v507
  %v555 = vunpack.c.h.b16 %v507
  %v556 = vunpack.c.l.b16 %v508
  %v557 = vunpack.c.h.b16 %v508
  %v558 = vunpack.c.l.b16 %v509
  %v559 = vunpack.c.h.b16 %v509
  %v560 = vunpack.c.l.b16 %v510
  %v561 = vunpack.c.h.b16 %v510
  %v562 = vunpack.c.l.b16 %v511
  %v563 = vunpack.c.h.b16 %v511
  %v564 = vunpack.c.l.b16 %v512
  %v565 = vunpack.c.h.b16 %v512
  %v566 = vunpack.c.l.b16 %v513
  %v567 = vunpack.c.h.b16 %v513
  %v568 = vunpack.c.l.b16 %v514
  %v569 = vunpack.c.h.b16 %v514
  %v570 = vunpack.c.l.b16 %v515
  %v571 = vunpack.c.h.b16 %v515
  %v572 = vunpack.c.l.b16 %v516
  %v573 = vunpack.c.h.b16 %v516
  %v574 = vunpack.c.l.b16 %v517
  %v575 = vunpack.c.h.b16 %v517
  %v576 = vunpack.c.l.b16 %v518
  %v577 = vunpack.c.h.b16 %v518
  %v578 = vunpack.c.l.b16 %v519
  %v579 = vunpack.c.h.b16 %v519
  %v580 = vunpack.c.l.b16 %v520
  %v581 = vunpack.c.h.b16 %v520
  %v582 = vunpack.c.l.b16 %v521
  %v583 = vunpack.c.h.b16 %v521
  %v584 = vunpack.c.l.b16 %v522
  %v585 = vunpack.c.h.b16 %v522
  %v586 = vunpack.c.l.b16 %v523
  %v587 = vunpack.c.h.b16 %v523
  %v588 = vunpack.c.l.b16 %v524
  %v589 = vunpack.c.h.b16 %v524
  %v590 = vunpack.c.l.b16 %v525
  %v591 = vpack.c.b16 %v548, %v548
  %v592 = vpack.c.b16 %v549, %v549
  %v593 = vpack.c.b16 %v550, %v550
  %v594 = vpack.c.b16 %v551, %v551
  %v595 = vpack.c.b16 %v552, %v552
  %v596 = vpack.c.b16 %v553, %v553
  %v597 = vpack.c.b16 %v554, %v554
  %v598 = vpack.c.b16 %v555, %v555
  %v599 = vpack.c.b16 %v556, %v556
  %v600 = vpack.c.b16 %v557, %v557
  %v601 = vpack.c.b16 %v558, %v558
  %v602 = vpack.c.b16 %v559, %v559
  %v603 = vpack.c.b16 %v560, %v560
  %v604 = vpack.c.b16 %v561, %v561
  %v605 = vpack.c.b16 %v562, %v562
  %v606 = vpack.c.b16 %v563, %v563
  %v607 = vpack.c.b16 %v564, %v564
  %v608 = vpack.c.b16 %v565, %v565
  %v609 = vpack.c.b16 %v566, %v566
  %v610 = vpack.c.b16 %v567, %v567
  %v611 = vpack.c.b16 %v568, %v568
  %v612 = vpack.c.b16 %v569, %v569
  %v613 = vpack.c.b16 %v570, %v570
  %v614 = vpack.c.b16 %v571, %v571
  %v615 = vpack.c.b16 %v572, %v572
  %v616 = vpack.c.b16 %v573, %v573
  %v617 = vpack.c.b16 %v574, %v574
  %v618 = vpack.c.b16 %v575, %v575
  %v619 = vpack.c.b16 %v576, %v576
  %v620 = vpack.c.b16 %v577, %v577
  %v621 = vpack.c.b16 %v578, %v578
  %v622 = vpack.c.b16 %v579, %v579
  %v623 = vpack.c.b16 %v580, %v580
  %v624 = vpack.c.b16 %v581, %v581
  %v625 = vpack.c.b16 %v582, %v582
  %v626 = vpack.c.b16 %v583, %v583
  %v627 = vpack.c.b16 %v584, %v584
  %v628 = vpack.c.b16 %v585, %v585
  %v629 = vpack.c.b16 %v586, %v586
  %v630 = vpack.c.b16 %v587, %v587
  %v631 = vpack.c.b16 %v588, %v588
  %v632 = vpack.c.b16 %v589, %v589
  %v633 = vpack.c.b16 %v590, %v590
  %vm677 = vcmask 519168
  %678 = vst.msk [vmem:[%s3] sm:$0xf] %vm677, %v591
  %679 = vst.msk [vmem:[%s3 + $0x4] sm:$0xf] %vm677, %v592
  %680 = vst.msk [vmem:[%s3 + $0x8] sm:$0xf] %vm677, %v593
  %681 = vst.msk [vmem:[%s3 + $0xc] sm:$0xf] %vm677, %v594
  %682 = vst.msk [vmem:[%s3 + $0x10] sm:$0xf] %vm677, %v595
  %683 = vst.msk [vmem:[%s3 + $0x14] sm:$0xf] %vm677, %v596
  %684 = vst.msk [vmem:[%s3 + $0x18] sm:$0xf] %vm677, %v597
  %685 = vst.msk [vmem:[%s3 + $0x1c] sm:$0xf] %vm677, %v598
  %686 = vst.msk [vmem:[%s3 + $0x20] sm:$0xf] %vm677, %v599
  %687 = vst.msk [vmem:[%s3 + $0x24] sm:$0xf] %vm677, %v600
  %688 = vst.msk [vmem:[%s3 + $0x28] sm:$0xf] %vm677, %v601
  %689 = vst.msk [vmem:[%s3 + $0x2c] sm:$0xf] %vm677, %v602
  %690 = vst.msk [vmem:[%s3 + $0x30] sm:$0xf] %vm677, %v603
  %691 = vst.msk [vmem:[%s3 + $0x34] sm:$0xf] %vm677, %v604
  %692 = vst.msk [vmem:[%s3 + $0x38] sm:$0xf] %vm677, %v605
  %693 = vst.msk [vmem:[%s3 + $0x3c] sm:$0xf] %vm677, %v606
  %694 = vst.msk [vmem:[%s3 + $0x40] sm:$0xf] %vm677, %v607
  %695 = vst.msk [vmem:[%s3 + $0x44] sm:$0xf] %vm677, %v608
  %696 = vst.msk [vmem:[%s3 + $0x48] sm:$0xf] %vm677, %v609
  %697 = vst.msk [vmem:[%s3 + $0x4c] sm:$0xf] %vm677, %v610
  %698 = vst.msk [vmem:[%s3 + $0x50] sm:$0xf] %vm677, %v611
  %699 = vst.msk [vmem:[%s3 + $0x54] sm:$0xf] %vm677, %v612
  %700 = vst.msk [vmem:[%s3 + $0x58] sm:$0xf] %vm677, %v613
  %701 = vst.msk [vmem:[%s3 + $0x5c] sm:$0xf] %vm677, %v614
  %702 = vst.msk [vmem:[%s3 + $0x60] sm:$0xf] %vm677, %v615
  %703 = vst.msk [vmem:[%s3 + $0x64] sm:$0xf] %vm677, %v616
  %704 = vst.msk [vmem:[%s3 + $0x68] sm:$0xf] %vm677, %v617
  %705 = vst.msk [vmem:[%s3 + $0x6c] sm:$0xf] %vm677, %v618
  %706 = vst.msk [vmem:[%s3 + $0x70] sm:$0xf] %vm677, %v619
  %707 = vst.msk [vmem:[%s3 + $0x74] sm:$0xf] %vm677, %v620
  %708 = vst.msk [vmem:[%s3 + $0x78] sm:$0xf] %vm677, %v621
  %709 = vst.msk [vmem:[%s3 + $0x7c] sm:$0xf] %vm677, %v622
  %710 = vst.msk [vmem:[%s3 + $0x80] sm:$0xf] %vm677, %v623
  %711 = vst.msk [vmem:[%s3 + $0x84] sm:$0xf] %vm677, %v624
  %712 = vst.msk [vmem:[%s3 + $0x88] sm:$0xf] %vm677, %v625
  %713 = vst.msk [vmem:[%s3 + $0x8c] sm:$0xf] %vm677, %v626
  %714 = vst.msk [vmem:[%s3 + $0x90] sm:$0xf] %vm677, %v627
  %715 = vst.msk [vmem:[%s3 + $0x94] sm:$0xf] %vm677, %v628
  %716 = vst.msk [vmem:[%s3 + $0x98] sm:$0xf] %vm677, %v629
  %717 = vst.msk [vmem:[%s3 + $0x9c] sm:$0xf] %vm677, %v630
  %718 = vst.msk [vmem:[%s3 + $0xa0] sm:$0xf] %vm677, %v631
  %719 = vst.msk [vmem:[%s3 + $0xa4] sm:$0xf] %vm677, %v632
  %vm720 = vcmask 516096
  %721 = vst.msk [vmem:[%s3 + $0xa8] sm:$0x1] %vm720, %v633
  // Predicated region
  $region14: #{matmul_bn.1} parent=0 // pred_check
    _
  $region15: #{matmul_bn.1} parent=0 // pred_check_branch
    %723 = sbr.rel (0) target = $region17
  $region16: #{matmul_bn.1} parent=0 // pred_region
    _
  $region17: #{matmul_bn.1} parent=0 // pred_fallthru
    _
  // Predicated region
  $region18: #{matmul_bn.1} parent=0 // pred_check
    _
  $region19: #{matmul_bn.1} parent=0 // pred_check_branch
    %725 = sbr.rel (0) target = $region21
  $region20: #{matmul_bn.1} parent=0 // pred_region
    _
  $region21: #{matmul_bn.1} parent=0 // pred_fallthru
    _

</llo_original>
